<compile_context>
chip_gen: v7x
topology: tpu7x:2x2x1
jax: 0.10.0
libtpu: 0.0.40
codegen_flags: <defaults>
</compile_context>

<pallas_src>
import math
import jax
import jax.numpy as jnp
from jax.experimental import pallas as pl
from jax.experimental.pallas import tpu as pltpu

LANE = 128
SUBLANE = 8
N_LAYERS = 7


def mlp2_kernel(x_ref, w_ref, b_ref, o_ref):
    """All 7 linear(+ReLU) layers fused; one batch tile per grid step.

    x_ref: (TB, P)    bf16  -- lane-padded batch tile of the input
    w_ref: (7, P, P)  bf16  -- all weights, zero-padded to P x P, resident
    b_ref: (8, P)     f32   -- row i = bias of layer i, zero-padded, resident
    o_ref: (TB, P)    f32   -- lane-dense output slab
    """
    b_all = b_ref[...]                        # (8, P) f32, load once
    h = x_ref[...]                            # (TB, P) bf16

    def layer(h_bf16, i, relu):
        # MXU matmul with f32 accumulation.
        y = jnp.dot(h_bf16, w_ref[i], preferred_element_type=jnp.float32)
        y = y + b_all[i:i + 1, :]             # bias add in f32 (VPU)
        if relu:
            y = jnp.maximum(y, 0.0)           # ReLU in f32; dropout = identity
        return y

    y = layer(h, 0, relu=True)
    for i in range(1, N_LAYERS - 1):
        # Cast to bf16 only right before the next MXU pass.
        y = layer(y.astype(jnp.bfloat16), i, relu=True)
    y = layer(y.astype(jnp.bfloat16), N_LAYERS - 1, relu=False)

    o_ref[...] = y                            # lane-dense f32 store


def pack_params(params, pad_dim):
    """Pack [(W[in,out] f32, b f32)] into one bf16 weight buffer + one f32 bias buffer."""
    n = len(params)
    w_packed = jnp.zeros((n, pad_dim, pad_dim), jnp.float32)
    b_rows = max(SUBLANE, n)                  # pad rows so the (8,128) tile rule holds
    b_packed = jnp.zeros((b_rows, pad_dim), jnp.float32)
    for i, (w, b) in enumerate(params):
        fin, fout = w.shape
        w_packed = w_packed.at[i, :fin, :fout].set(w)
        b_packed = b_packed.at[i, :fout].set(b.reshape(-1))
    return w_packed.astype(jnp.bfloat16), b_packed


def mlp2_forward(x, w_packed, b_packed, out_dim, *, tile_batch=8):
    """x: [batch, input_dim] f32. Returns [batch, out_dim] f32."""
    batch, in_dim = x.shape
    n_layers, pad_dim, _ = w_packed.shape
    assert in_dim <= pad_dim and out_dim <= pad_dim

    # Pad batch to a multiple of the batch tile and lanes to pad_dim; cast to bf16.
    b_pad = pl.cdiv(batch, tile_batch) * tile_batch
    x_p = jnp.zeros((b_pad, pad_dim), jnp.bfloat16)
    x_p = x_p.at[:batch, :in_dim].set(x.astype(jnp.bfloat16))

    grid = (b_pad // tile_batch,)

    # Advisory cost estimate (uses the padded compute; cheap scheduling hint).
    flops = 2 * b_pad * n_layers * pad_dim * pad_dim
    bytes_accessed = (x_p.size * 2 + w_packed.size * 2
                      + b_packed.size * 4 + b_pad * pad_dim * 4)

    out = pl.pallas_call(
        mlp2_kernel,
        out_shape=jax.ShapeDtypeStruct((b_pad, pad_dim), jnp.float32),
        grid=grid,
        in_specs=[
            pl.BlockSpec((tile_batch, pad_dim), lambda i: (i, 0)),   # x: batch-tiled
            pl.BlockSpec(w_packed.shape, lambda i: (0, 0, 0)),       # weights resident
            pl.BlockSpec(b_packed.shape, lambda i: (0, 0)),          # biases resident
        ],
        out_specs=pl.BlockSpec((tile_batch, pad_dim), lambda i: (i, 0)),
        compiler_params=pltpu.CompilerParams(
            dimension_semantics=("parallel",)),
        cost_estimate=pl.CostEstimate(
            flops=flops, transcendentals=0, bytes_accessed=bytes_accessed),
    )(x_p, w_packed, b_packed)

    return out[:batch, :out_dim]


def xavier_uniform(key, fan_in, fan_out):
    """Matches torch.nn.init.xavier_uniform_ (gain=1); stored as [in, out]."""
    limit = math.sqrt(6.0 / (fan_in + fan_out))
    return jax.random.uniform(key, (fan_in, fan_out), jnp.float32,
                              minval=-limit, maxval=limit)


def make_params(key, input_dim, hidden_dim, output_dim):
    hid1 = hidden_dim
    hid2 = hid1 // 2
    hid3 = hid2 // 2
    dims = [(input_dim, hid1), (hid1, hid1), (hid1, hid2), (hid2, hid2),
            (hid2, hid3), (hid3, hid3), (hid3, output_dim)]
    keys = jax.random.split(key, len(dims))
    params = []
    for k, (fin, fout) in zip(keys, dims):
        w = xavier_uniform(k, fin, fout)
        b = jnp.zeros((fout,), jnp.float32)   # zeros_(lin.bias)
        params.append((w, b))
    return params


if __name__ == "__main__":
    key = jax.random.PRNGKey(0)
    k_in, k_par = jax.random.split(key)

    batch = 8
    input_dim = 32
    hidden_dim = 64    # flags['hidden_dim']
    output_dim = 8

    # input.view(input.shape[0], input_dim): construct it already flat.
    x = jax.random.normal(k_in, (batch, input_dim), jnp.float32)
    params = make_params(k_par, input_dim, hidden_dim, output_dim)

    # All feature dims (8..64) <= 128, so pad everything to one 128-wide slab.
    # TODO(synk): for hidden_dim > 128 the weight packing would need per-layer
    #             K/N tiling instead of a single padded (P, P) slab.
    pad_dim = LANE
    w_packed, b_packed = pack_params(params, pad_dim)

    out = mlp2_forward(x, w_packed, b_packed, output_dim, tile_batch=8)
    jax.block_until_ready(out)

    # Reference path using the SAME bf16 matmul inputs / f32 accumulation.
    ref = x
    for i, (w, b) in enumerate(params):
        ref = jnp.dot(ref.astype(jnp.bfloat16), w.astype(jnp.bfloat16),
                      preferred_element_type=jnp.float32) + b
        if i < len(params) - 1:
            ref = jnp.maximum(ref, 0.0)

    assert out.shape == (batch, output_dim)
    assert jnp.allclose(out, ref, atol=1e-2, rtol=1e-2), \
        float(jnp.max(jnp.abs(out - ref)))

    print("KERNEL_OK")
</pallas_src>

<mosaic_0001>
module attributes {stable_mosaic.version = 11 : i64} {
  func.func @mlp2_kernel(%arg0: i32, %arg1: memref<8x128xbf16, #tpu.memory_space<vmem>>, %arg2: memref<7x128x128xbf16, #tpu.memory_space<vmem>>, %arg3: memref<8x128xf32, #tpu.memory_space<vmem>>, %arg4: memref<8x128xf32, #tpu.memory_space<vmem>>) attributes {dimension_semantics = [#tpu.dimension_semantics<parallel>], iteration_bounds = array<i64: 1>, scalar_prefetch = 0 : i64, scratch_operands = 0 : i64, tpu.core_type = #tpu.core_type<tc>, window_params = [{transform_indices = @transform_0, window_bounds = array<i64: 8, 128>}, {pipeline_mode = #tpu.pipeline_mode<synchronous>, transform_indices = @transform_1, window_bounds = array<i64: 7, 128, 128>}, {pipeline_mode = #tpu.pipeline_mode<synchronous>, transform_indices = @transform_2, window_bounds = array<i64: 8, 128>}, {transform_indices = @transform_3, window_bounds = array<i64: 8, 128>}]} {
    %c0 = arith.constant 0 : index
    %c0_0 = arith.constant 0 : index
    %0 = vector.load %arg3[%c0, %c0_0] : memref<8x128xf32, #tpu.memory_space<vmem>>, vector<8x128xf32>
    %c0_1 = arith.constant 0 : index
    %c0_2 = arith.constant 0 : index
    %1 = vector.load %arg1[%c0_1, %c0_2] : memref<8x128xbf16, #tpu.memory_space<vmem>>, vector<8x128xbf16>
    %c0_3 = arith.constant 0 : index
    %c0_4 = arith.constant 0 : index
    %c0_5 = arith.constant 0 : index
    %2 = vector.load %arg2[%c0_3, %c0_4, %c0_5] : memref<7x128x128xbf16, #tpu.memory_space<vmem>>, vector<1x128x128xbf16>
    %3 = vector.shape_cast %2 : vector<1x128x128xbf16> to vector<128x128xbf16>
    %cst = arith.constant dense<0.000000e+00> : vector<8x128xf32>
    %4 = tpu.matmul %1, %3, %cst {dimension_numbers = #tpu.dot_dimension_numbers<[1], [0], [0], [1], [0, 0, 1, 1], [], []>} : vector<8x128xbf16>, vector<128x128xbf16>, vector<8x128xf32> -> vector<8x128xf32>
    %5 = vector.extract_strided_slice %0 {offsets = [0, 0], sizes = [1, 128], strides = [1, 1]} : vector<8x128xf32> to vector<1x128xf32>
    %6 = vector.broadcast %5 : vector<1x128xf32> to vector<8x128xf32>
    %7 = arith.addf %4, %6 : vector<8x128xf32>
    %cst_6 = arith.constant 0.000000e+00 : f32
    %8 = vector.broadcast %cst_6 : f32 to vector<8x128xf32>
    %9 = arith.maximumf %7, %8 : vector<8x128xf32>
    %10 = arith.truncf %9 : vector<8x128xf32> to vector<8x128xbf16>
    %c1 = arith.constant 1 : index
    %c0_7 = arith.constant 0 : index
    %c0_8 = arith.constant 0 : index
    %11 = vector.load %arg2[%c1, %c0_7, %c0_8] : memref<7x128x128xbf16, #tpu.memory_space<vmem>>, vector<1x128x128xbf16>
    %12 = vector.shape_cast %11 : vector<1x128x128xbf16> to vector<128x128xbf16>
    %cst_9 = arith.constant dense<0.000000e+00> : vector<8x128xf32>
    %13 = tpu.matmul %10, %12, %cst_9 {dimension_numbers = #tpu.dot_dimension_numbers<[1], [0], [0], [1], [0, 0, 1, 1], [], []>} : vector<8x128xbf16>, vector<128x128xbf16>, vector<8x128xf32> -> vector<8x128xf32>
    %14 = vector.extract_strided_slice %0 {offsets = [1, 0], sizes = [1, 128], strides = [1, 1]} : vector<8x128xf32> to vector<1x128xf32>
    %15 = vector.broadcast %14 : vector<1x128xf32> to vector<8x128xf32>
    %16 = arith.addf %13, %15 : vector<8x128xf32>
    %cst_10 = arith.constant 0.000000e+00 : f32
    %17 = vector.broadcast %cst_10 : f32 to vector<8x128xf32>
    %18 = arith.maximumf %16, %17 : vector<8x128xf32>
    %19 = arith.truncf %18 : vector<8x128xf32> to vector<8x128xbf16>
    %c2 = arith.constant 2 : index
    %c0_11 = arith.constant 0 : index
    %c0_12 = arith.constant 0 : index
    %20 = vector.load %arg2[%c2, %c0_11, %c0_12] : memref<7x128x128xbf16, #tpu.memory_space<vmem>>, vector<1x128x128xbf16>
    %21 = vector.shape_cast %20 : vector<1x128x128xbf16> to vector<128x128xbf16>
    %cst_13 = arith.constant dense<0.000000e+00> : vector<8x128xf32>
    %22 = tpu.matmul %19, %21, %cst_13 {dimension_numbers = #tpu.dot_dimension_numbers<[1], [0], [0], [1], [0, 0, 1, 1], [], []>} : vector<8x128xbf16>, vector<128x128xbf16>, vector<8x128xf32> -> vector<8x128xf32>
    %23 = vector.extract_strided_slice %0 {offsets = [2, 0], sizes = [1, 128], strides = [1, 1]} : vector<8x128xf32> to vector<1x128xf32>
    %24 = vector.broadcast %23 : vector<1x128xf32> to vector<8x128xf32>
    %25 = arith.addf %22, %24 : vector<8x128xf32>
    %cst_14 = arith.constant 0.000000e+00 : f32
    %26 = vector.broadcast %cst_14 : f32 to vector<8x128xf32>
    %27 = arith.maximumf %25, %26 : vector<8x128xf32>
    %28 = arith.truncf %27 : vector<8x128xf32> to vector<8x128xbf16>
    %c3 = arith.constant 3 : index
    %c0_15 = arith.constant 0 : index
    %c0_16 = arith.constant 0 : index
    %29 = vector.load %arg2[%c3, %c0_15, %c0_16] : memref<7x128x128xbf16, #tpu.memory_space<vmem>>, vector<1x128x128xbf16>
    %30 = vector.shape_cast %29 : vector<1x128x128xbf16> to vector<128x128xbf16>
    %cst_17 = arith.constant dense<0.000000e+00> : vector<8x128xf32>
    %31 = tpu.matmul %28, %30, %cst_17 {dimension_numbers = #tpu.dot_dimension_numbers<[1], [0], [0], [1], [0, 0, 1, 1], [], []>} : vector<8x128xbf16>, vector<128x128xbf16>, vector<8x128xf32> -> vector<8x128xf32>
    %32 = vector.extract_strided_slice %0 {offsets = [3, 0], sizes = [1, 128], strides = [1, 1]} : vector<8x128xf32> to vector<1x128xf32>
    %33 = vector.broadcast %32 : vector<1x128xf32> to vector<8x128xf32>
    %34 = arith.addf %31, %33 : vector<8x128xf32>
    %cst_18 = arith.constant 0.000000e+00 : f32
    %35 = vector.broadcast %cst_18 : f32 to vector<8x128xf32>
    %36 = arith.maximumf %34, %35 : vector<8x128xf32>
    %37 = arith.truncf %36 : vector<8x128xf32> to vector<8x128xbf16>
    %c4 = arith.constant 4 : index
    %c0_19 = arith.constant 0 : index
    %c0_20 = arith.constant 0 : index
    %38 = vector.load %arg2[%c4, %c0_19, %c0_20] : memref<7x128x128xbf16, #tpu.memory_space<vmem>>, vector<1x128x128xbf16>
    %39 = vector.shape_cast %38 : vector<1x128x128xbf16> to vector<128x128xbf16>
    %cst_21 = arith.constant dense<0.000000e+00> : vector<8x128xf32>
    %40 = tpu.matmul %37, %39, %cst_21 {dimension_numbers = #tpu.dot_dimension_numbers<[1], [0], [0], [1], [0, 0, 1, 1], [], []>} : vector<8x128xbf16>, vector<128x128xbf16>, vector<8x128xf32> -> vector<8x128xf32>
    %41 = vector.extract_strided_slice %0 {offsets = [4, 0], sizes = [1, 128], strides = [1, 1]} : vector<8x128xf32> to vector<1x128xf32>
    %42 = vector.broadcast %41 : vector<1x128xf32> to vector<8x128xf32>
    %43 = arith.addf %40, %42 : vector<8x128xf32>
    %cst_22 = arith.constant 0.000000e+00 : f32
    %44 = vector.broadcast %cst_22 : f32 to vector<8x128xf32>
    %45 = arith.maximumf %43, %44 : vector<8x128xf32>
    %46 = arith.truncf %45 : vector<8x128xf32> to vector<8x128xbf16>
    %c5 = arith.constant 5 : index
    %c0_23 = arith.constant 0 : index
    %c0_24 = arith.constant 0 : index
    %47 = vector.load %arg2[%c5, %c0_23, %c0_24] : memref<7x128x128xbf16, #tpu.memory_space<vmem>>, vector<1x128x128xbf16>
    %48 = vector.shape_cast %47 : vector<1x128x128xbf16> to vector<128x128xbf16>
    %cst_25 = arith.constant dense<0.000000e+00> : vector<8x128xf32>
    %49 = tpu.matmul %46, %48, %cst_25 {dimension_numbers = #tpu.dot_dimension_numbers<[1], [0], [0], [1], [0, 0, 1, 1], [], []>} : vector<8x128xbf16>, vector<128x128xbf16>, vector<8x128xf32> -> vector<8x128xf32>
    %50 = vector.extract_strided_slice %0 {offsets = [5, 0], sizes = [1, 128], strides = [1, 1]} : vector<8x128xf32> to vector<1x128xf32>
    %51 = vector.broadcast %50 : vector<1x128xf32> to vector<8x128xf32>
    %52 = arith.addf %49, %51 : vector<8x128xf32>
    %cst_26 = arith.constant 0.000000e+00 : f32
    %53 = vector.broadcast %cst_26 : f32 to vector<8x128xf32>
    %54 = arith.maximumf %52, %53 : vector<8x128xf32>
    %55 = arith.truncf %54 : vector<8x128xf32> to vector<8x128xbf16>
    %c6 = arith.constant 6 : index
    %c0_27 = arith.constant 0 : index
    %c0_28 = arith.constant 0 : index
    %56 = vector.load %arg2[%c6, %c0_27, %c0_28] : memref<7x128x128xbf16, #tpu.memory_space<vmem>>, vector<1x128x128xbf16>
    %57 = vector.shape_cast %56 : vector<1x128x128xbf16> to vector<128x128xbf16>
    %cst_29 = arith.constant dense<0.000000e+00> : vector<8x128xf32>
    %58 = tpu.matmul %55, %57, %cst_29 {dimension_numbers = #tpu.dot_dimension_numbers<[1], [0], [0], [1], [0, 0, 1, 1], [], []>} : vector<8x128xbf16>, vector<128x128xbf16>, vector<8x128xf32> -> vector<8x128xf32>
    %59 = vector.extract_strided_slice %0 {offsets = [6, 0], sizes = [1, 128], strides = [1, 1]} : vector<8x128xf32> to vector<1x128xf32>
    %60 = vector.broadcast %59 : vector<1x128xf32> to vector<8x128xf32>
    %61 = arith.addf %58, %60 : vector<8x128xf32>
    %c0_30 = arith.constant 0 : index
    %c0_31 = arith.constant 0 : index
    %62 = vector.load %arg4[%c0_30, %c0_31] : memref<8x128xf32, #tpu.memory_space<vmem>>, vector<8x128xf32>
    tpu.vector_store %arg4[%c0_30, %c0_31], %61 {strides = array<i32>} : memref<8x128xf32, #tpu.memory_space<vmem>>, vector<8x128xf32>,
    return
  }
  func.func @transform_0(%arg0: i32) -> (i32, i32) {
    %c0_i32 = arith.constant 0 : i32
    %c0_i32_0 = arith.constant 0 : i32
    return %arg0, %c0_i32 : i32, i32
  }
  func.func @transform_1(%arg0: i32) -> (i32, i32, i32) {
    %c0_i32 = arith.constant 0 : i32
    %c0_i32_0 = arith.constant 0 : i32
    %c0_i32_1 = arith.constant 0 : i32
    %c0_i32_2 = arith.constant 0 : i32
    return %c0_i32, %c0_i32_0, %c0_i32_1 : i32, i32, i32
  }
  func.func @transform_2(%arg0: i32) -> (i32, i32) {
    %c0_i32 = arith.constant 0 : i32
    %c0_i32_0 = arith.constant 0 : i32
    %c0_i32_1 = arith.constant 0 : i32
    return %c0_i32, %c0_i32_0 : i32, i32
  }
  func.func @transform_3(%arg0: i32) -> (i32, i32) {
    %c0_i32 = arith.constant 0 : i32
    %c0_i32_0 = arith.constant 0 : i32
    return %arg0, %c0_i32 : i32, i32
  }
}

</mosaic_0001>

<llo_original>
// kernel: tpu_custom_call.1
$region0: #{tpu_custom_call.1}
  #allocation0 [shape = 'u32[]', space=smem, size = 0x4, offset = 0x4, fixed_abs, tag = 'smem constant byte address 0x4 - core index']
  #allocation1 [shape = 'u32[144,128]{1,0:T(1,128)}', space=vmem, size = 0x12000, scoped, tag = 'internal scratch']
  %s0 = inlined_call_operand.hbm [shape: bf16[8,128], index: 0, kind: input, shape index: {}]
  %s1 = inlined_call_operand.hbm [shape: bf16[7,128,128], index: 1, kind: input, shape index: {}]
  %s2 = inlined_call_operand.hbm [shape: f32[8,128], index: 2, kind: input, shape index: {}]
  %s3 = inlined_call_operand.hbm [shape: f32[8,128], index: 3, kind: output, shape index: {}]
  %s4 = sld [smem:[#allocation0]]
  $region34: #{tpu_custom_call.1} parent=0
    _
  %s6 = ssub.s32 1, %s4
  %s7 = scalar_select 0, %s6, %s4
  $region1: #{tpu_custom_call.1} parent=0
    #allocation2 [shape = 'u8[2048]{0}', space=vmem, size = 0x800, scoped, tag = 'input window, operand 0, single buffered']
    #allocation3 [shape = 's32[1]{0}', space=sflag, size = 0x4, scoped, tag = 'scoped memory for tpu_custom_call.1']
    #allocation4 [shape = 's32[1]{0}', space=sflag, size = 0x4, scoped, tag = 'scoped memory for tpu_custom_call.1']
    #allocation5 [shape = 'u8[229376]{0}', space=vmem, size = 0x38000, scoped, tag = 'input window, operand 1, single buffered']
    #allocation6 [shape = 's32[1]{0}', space=sflag, size = 0x4, scoped, tag = 'scoped memory for tpu_custom_call.1']
    #allocation7 [shape = 'u8[4096]{0}', space=vmem, size = 0x1000, scoped, tag = 'input window, operand 2, single buffered']
    #allocation8 [shape = 'u8[4096]{0}', space=vmem, size = 0x1000, scoped, tag = 'output window, operand 0, single buffered']
    %8 = vsyncpa [#allocation3], 0
    %9 = vsyncpa [#allocation6], 0
    %10 = vsyncpa [#allocation4], 0
    // Predicated region
    $region2: #{tpu_custom_call.1} parent=1 // pred_check
      _
    $region3: #{tpu_custom_call.1} parent=1 // pred_check_branch
      %12 = sbr.rel (0) target = $region5
    $region4: #{tpu_custom_call.1} parent=1 // pred_region
      %s14 = ssub.s32 64, 64
      %15 = vsyncadd [#allocation3], %s14
      %s17 = sshll.u32 [#allocation2], 4
      %s18 = int_to_ptr.vmem [resolvable:$true] %s17
      %20 = dma.hbm_to_vmem [thread:$0]  %s0, 64, %s18, [#allocation3]
    $region5: #{tpu_custom_call.1} parent=1 // pred_fallthru
      _
    // Predicated region
    $region6: #{tpu_custom_call.1} parent=1 // pred_check
      _
    $region7: #{tpu_custom_call.1} parent=1 // pred_check_branch
      %22 = sbr.rel (0) target = $region9
    $region8: #{tpu_custom_call.1} parent=1 // pred_region
      %s24 = ssub.s32 7168, 7168
      %25 = vsyncadd [#allocation6], %s24
      %s26 = sshll.u32 [#allocation5], 4
      %s27 = int_to_ptr.vmem [resolvable:$true] %s26
      %32 = dma.hbm_to_vmem [thread:$0]  %s1, 7168, %s27, [#allocation6], 64, 64, 4
    $region9: #{tpu_custom_call.1} parent=1 // pred_fallthru
      _
    // Predicated region
    $region10: #{tpu_custom_call.1} parent=1 // pred_check
      _
    $region11: #{tpu_custom_call.1} parent=1 // pred_check_branch
      %34 = sbr.rel (0) target = $region13
    $region12: #{tpu_custom_call.1} parent=1 // pred_region
      %s36 = ssub.s32 128, 128
      %37 = vsyncadd [#allocation6], %s36
      %s39 = sshll.u32 [#allocation7], 4
      %s40 = int_to_ptr.vmem [resolvable:$true] %s39
      %42 = dma.hbm_to_vmem [thread:$0]  %s2, 128, %s40, [#allocation6]
    $region13: #{tpu_custom_call.1} parent=1 // pred_fallthru
      _
    // Predicated region
    $region14: #{tpu_custom_call.1} parent=1 // pred_check
      _
    $region15: #{tpu_custom_call.1} parent=1 // pred_check_branch
      %44 = sbr.rel (0) target = $region17
    $region16: #{tpu_custom_call.1} parent=1 // pred_region
      %45 = dma.done [#allocation3], 64
    $region17: #{tpu_custom_call.1} parent=1 // pred_fallthru
      _
    // Predicated region
    $region18: #{tpu_custom_call.1} parent=1 // pred_check
      _
    $region19: #{tpu_custom_call.1} parent=1 // pred_check_branch
      %47 = sbr.rel (0) target = $region21
    $region20: #{tpu_custom_call.1} parent=1 // pred_region
      %48 = dma.done [#allocation6], 7168
    $region21: #{tpu_custom_call.1} parent=1 // pred_fallthru
      _
    // Predicated region
    $region22: #{tpu_custom_call.1} parent=1 // pred_check
      _
    $region23: #{tpu_custom_call.1} parent=1 // pred_check_branch
      %50 = sbr.rel (0) target = $region25
    $region24: #{tpu_custom_call.1} parent=1 // pred_region
      %51 = dma.done [#allocation6], 128
    $region25: #{tpu_custom_call.1} parent=1 // pred_fallthru
      _
    %v53 = vld [vmem:[#allocation7] sm:$0xff]
    %v54 = vld [vmem:[#allocation2] sm:$0xf]
    %v55 = vld [vmem:[#allocation5] sm:$0xf]
    %v56 = vld [vmem:[#allocation5 + $0x4] sm:$0xf]
    %v57 = vld [vmem:[#allocation5 + $0x8] sm:$0xf]
    %v58 = vld [vmem:[#allocation5 + $0xc] sm:$0xf]
    %v59 = vld [vmem:[#allocation5 + $0x10] sm:$0xf]
    %v60 = vld [vmem:[#allocation5 + $0x14] sm:$0xf]
    %v61 = vld [vmem:[#allocation5 + $0x18] sm:$0xf]
    %v62 = vld [vmem:[#allocation5 + $0x1c] sm:$0xf]
    %v63 = vld [vmem:[#allocation5 + $0x20] sm:$0xf]
    %v64 = vld [vmem:[#allocation5 + $0x24] sm:$0xf]
    %v65 = vld [vmem:[#allocation5 + $0x28] sm:$0xf]
    %v66 = vld [vmem:[#allocation5 + $0x2c] sm:$0xf]
    %v67 = vld [vmem:[#allocation5 + $0x30] sm:$0xf]
    %v68 = vld [vmem:[#allocation5 + $0x34] sm:$0xf]
    %v69 = vld [vmem:[#allocation5 + $0x38] sm:$0xf]
    %v70 = vld [vmem:[#allocation5 + $0x3c] sm:$0xf]
    %v71 = vlaneseq
    %v72 = vshrl.u32 %v71, 7
    %v73 = vsub.s32 0, %v72
    %v74 = vrot.slane %v53, %v73
    %v91 = vunpack.c.l.b16 %v55
    %v92 = vunpack.c.l.b16 %v56
    %v93 = vunpack.c.l.b16 %v57
    %v94 = vunpack.c.l.b16 %v58
    %v95 = vunpack.c.l.b16 %v59
    %v96 = vunpack.c.l.b16 %v60
    %v97 = vunpack.c.l.b16 %v61
    %v98 = vunpack.c.l.b16 %v62
    %v99 = vunpack.c.l.b16 %v63
    %v100 = vunpack.c.l.b16 %v64
    %v101 = vunpack.c.l.b16 %v65
    %v102 = vunpack.c.l.b16 %v66
    %v103 = vunpack.c.l.b16 %v67
    %v104 = vunpack.c.l.b16 %v68
    %v105 = vunpack.c.l.b16 %v69
    %v106 = vunpack.c.l.b16 %v70
    %v107 = vpack.c.b16 %v92, %v91
    %v108 = vpack.c.b16 %v94, %v93
    %v109 = vpack.c.b16 %v96, %v95
    %v110 = vpack.c.b16 %v98, %v97
    %v111 = vpack.c.b16 %v100, %v99
    %v112 = vpack.c.b16 %v102, %v101
    %v113 = vpack.c.b16 %v104, %v103
    %v114 = vpack.c.b16 %v106, %v105
    %123 = vmatprep.subr.bf16.mxu0 0
    %124 = vmatpush1.bf16.msra.mxu0 %v107
    %125 = vmatprep.subr.bf16.mxu0 0
    %126 = vmatpush1.bf16.msra.mxu0 %v108
    %127 = vmatprep.subr.bf16.mxu0 0
    %128 = vmatpush1.bf16.msra.mxu0 %v109
    %129 = vmatprep.subr.bf16.mxu0 0
    %130 = vmatpush1.bf16.msra.mxu0 %v110
    %131 = vmatprep.subr.bf16.mxu0 0
    %132 = vmatpush1.bf16.msra.mxu0 %v111
    %133 = vmatprep.subr.bf16.mxu0 0
    %134 = vmatpush1.bf16.msra.mxu0 %v112
    %135 = vmatprep.subr.bf16.mxu0 0
    %136 = vmatpush1.bf16.msra.mxu0 %v113
    %137 = vmatprep.subr.bf16.mxu0 0
    %138 = vmatpush1.bf16.msra.mxu0 %v114
    %139 = vmatprep.subr.bf16.mxu0 0
    %140 = vmatpush1.bf16.msra.mxu0 0
    %141 = vmatprep.subr.bf16.mxu0 0
    %142 = vmatpush1.bf16.msra.mxu0 0
    %143 = vmatprep.subr.bf16.mxu0 0
    %144 = vmatpush1.bf16.msra.mxu0 0
    %145 = vmatprep.subr.bf16.mxu0 0
    %146 = vmatpush1.bf16.msra.mxu0 0
    %147 = vmatprep.subr.bf16.mxu0 0
    %148 = vmatpush1.bf16.msra.mxu0 0
    %149 = vmatprep.subr.bf16.mxu0 0
    %150 = vmatpush1.bf16.msra.mxu0 0
    %151 = vmatprep.subr.bf16.mxu0 0
    %152 = vmatpush1.bf16.msra.mxu0 0
    %153 = vmatprep.subr.bf16.mxu0 0
    %154 = vmatpush1.bf16.msra.mxu0 0
    %155 = vmatprep.mubr.bf16.mxu0 0
    %156 = vmatmul.mubr.bf16.gmra.mrb[0].mxu0 %v54
    %v157 = vpop.f32.mrb[0].mxu0
    %v158 = vadd.f32 %v74, %v157
    %v159 = vpop.f32.mrb[0].mxu0
    %v160 = vpop.f32.mrb[0].mxu0
    %v161 = vpop.f32.mrb[0].mxu0
    %162 = vdwg.mxu0
    %v163 = vmax.f32 %v158, 0.0
    %v164 = vpack.c.bf16 %v163, %v163
    %s165 = scalar_lea.vmem [#allocation5], 64
    %v166 = vld [vmem:[%s165] sm:$0xf]
    %v167 = vld [vmem:[%s165 + $0x4] sm:$0xf]
    %v168 = vld [vmem:[%s165 + $0x8] sm:$0xf]
    %v169 = vld [vmem:[%s165 + $0xc] sm:$0xf]
    %v170 = vld [vmem:[%s165 + $0x10] sm:$0xf]
    %v171 = vld [vmem:[%s165 + $0x14] sm:$0xf]
    %v172 = vld [vmem:[%s165 + $0x18] sm:$0xf]
    %v173 = vld [vmem:[%s165 + $0x1c] sm:$0xf]
    %v174 = vld [vmem:[%s165 + $0x20] sm:$0xf]
    %v175 = vld [vmem:[%s165 + $0x24] sm:$0xf]
    %v176 = vld [vmem:[%s165 + $0x28] sm:$0xf]
    %v177 = vld [vmem:[%s165 + $0x2c] sm:$0xf]
    %v178 = vld [vmem:[%s165 + $0x30] sm:$0xf]
    %v179 = vld [vmem:[%s165 + $0x34] sm:$0xf]
    %v180 = vld [vmem:[%s165 + $0x38] sm:$0xf]
    %v181 = vld [vmem:[%s165 + $0x3c] sm:$0xf]
    %v182 = vlaneseq
    %v183 = vshrl.u32 %v182, 7
    %v184 = vsub.s32 1, %v183
    %v185 = vrot.slane %v53, %v184
    %v202 = vunpack.c.l.b16 %v166
    %v203 = vunpack.c.l.b16 %v167
    %v204 = vunpack.c.l.b16 %v168
    %v205 = vunpack.c.l.b16 %v169
    %v206 = vunpack.c.l.b16 %v170
    %v207 = vunpack.c.l.b16 %v171
    %v208 = vunpack.c.l.b16 %v172
    %v209 = vunpack.c.l.b16 %v173
    %v210 = vunpack.c.l.b16 %v174
    %v211 = vunpack.c.l.b16 %v175
    %v212 = vunpack.c.l.b16 %v176
    %v213 = vunpack.c.l.b16 %v177
    %v214 = vunpack.c.l.b16 %v178
    %v215 = vunpack.c.l.b16 %v179
    %v216 = vunpack.c.l.b16 %v180
    %v217 = vunpack.c.l.b16 %v181
    %v218 = vpack.c.b16 %v203, %v202
    %v219 = vpack.c.b16 %v205, %v204
    %v220 = vpack.c.b16 %v207, %v206
    %v221 = vpack.c.b16 %v209, %v208
    %v222 = vpack.c.b16 %v211, %v210
    %v223 = vpack.c.b16 %v213, %v212
    %v224 = vpack.c.b16 %v215, %v214
    %v225 = vpack.c.b16 %v217, %v216
    %234 = vmatprep.subr.bf16.mxu0 0
    %235 = vmatpush1.bf16.msra.mxu0 %v218
    %236 = vmatprep.subr.bf16.mxu0 0
    %237 = vmatpush1.bf16.msra.mxu0 %v219
    %238 = vmatprep.subr.bf16.mxu0 0
    %239 = vmatpush1.bf16.msra.mxu0 %v220
    %240 = vmatprep.subr.bf16.mxu0 0
    %241 = vmatpush1.bf16.msra.mxu0 %v221
    %242 = vmatprep.subr.bf16.mxu0 0
    %243 = vmatpush1.bf16.msra.mxu0 %v222
    %244 = vmatprep.subr.bf16.mxu0 0
    %245 = vmatpush1.bf16.msra.mxu0 %v223
    %246 = vmatprep.subr.bf16.mxu0 0
    %247 = vmatpush1.bf16.msra.mxu0 %v224
    %248 = vmatprep.subr.bf16.mxu0 0
    %249 = vmatpush1.bf16.msra.mxu0 %v225
    %250 = vmatprep.subr.bf16.mxu0 0
    %251 = vmatpush1.bf16.msra.mxu0 0
    %252 = vmatprep.subr.bf16.mxu0 0
    %253 = vmatpush1.bf16.msra.mxu0 0
    %254 = vmatprep.subr.bf16.mxu0 0
    %255 = vmatpush1.bf16.msra.mxu0 0
    %256 = vmatprep.subr.bf16.mxu0 0
    %257 = vmatpush1.bf16.msra.mxu0 0
    %258 = vmatprep.subr.bf16.mxu0 0
    %259 = vmatpush1.bf16.msra.mxu0 0
    %260 = vmatprep.subr.bf16.mxu0 0
    %261 = vmatpush1.bf16.msra.mxu0 0
    %262 = vmatprep.subr.bf16.mxu0 0
    %263 = vmatpush1.bf16.msra.mxu0 0
    %264 = vmatprep.subr.bf16.mxu0 0
    %265 = vmatpush1.bf16.msra.mxu0 0
    %266 = vmatprep.mubr.bf16.mxu0 0
    %267 = vmatmul.mubr.bf16.gmra.mrb[0].mxu0 %v164
    %v268 = vpop.f32.mrb[0].mxu0
    %v269 = vadd.f32 %v185, %v268
    %v270 = vpop.f32.mrb[0].mxu0
    %v271 = vpop.f32.mrb[0].mxu0
    %v272 = vpop.f32.mrb[0].mxu0
    %273 = vdwg.mxu0
    %v274 = vmax.f32 %v269, 0.0
    %v275 = vpack.c.bf16 %v274, %v274
    %s276 = scalar_lea.vmem [#allocation5], 128
    %v277 = vld [vmem:[%s276] sm:$0xf]
    %v278 = vld [vmem:[%s276 + $0x4] sm:$0xf]
    %v279 = vld [vmem:[%s276 + $0x8] sm:$0xf]
    %v280 = vld [vmem:[%s276 + $0xc] sm:$0xf]
    %v281 = vld [vmem:[%s276 + $0x10] sm:$0xf]
    %v282 = vld [vmem:[%s276 + $0x14] sm:$0xf]
    %v283 = vld [vmem:[%s276 + $0x18] sm:$0xf]
    %v284 = vld [vmem:[%s276 + $0x1c] sm:$0xf]
    %v285 = vld [vmem:[%s276 + $0x20] sm:$0xf]
    %v286 = vld [vmem:[%s276 + $0x24] sm:$0xf]
    %v287 = vld [vmem:[%s276 + $0x28] sm:$0xf]
    %v288 = vld [vmem:[%s276 + $0x2c] sm:$0xf]
    %v289 = vld [vmem:[%s276 + $0x30] sm:$0xf]
    %v290 = vld [vmem:[%s276 + $0x34] sm:$0xf]
    %v291 = vld [vmem:[%s276 + $0x38] sm:$0xf]
    %v292 = vld [vmem:[%s276 + $0x3c] sm:$0xf]
    %v293 = vlaneseq
    %v294 = vshrl.u32 %v293, 7
    %v295 = vsub.s32 2, %v294
    %v296 = vrot.slane %v53, %v295
    %v313 = vunpack.c.l.b16 %v277
    %v314 = vunpack.c.l.b16 %v278
    %v315 = vunpack.c.l.b16 %v279
    %v316 = vunpack.c.l.b16 %v280
    %v317 = vunpack.c.l.b16 %v281
    %v318 = vunpack.c.l.b16 %v282
    %v319 = vunpack.c.l.b16 %v283
    %v320 = vunpack.c.l.b16 %v284
    %v321 = vunpack.c.l.b16 %v285
    %v322 = vunpack.c.l.b16 %v286
    %v323 = vunpack.c.l.b16 %v287
    %v324 = vunpack.c.l.b16 %v288
    %v325 = vunpack.c.l.b16 %v289
    %v326 = vunpack.c.l.b16 %v290
    %v327 = vunpack.c.l.b16 %v291
    %v328 = vunpack.c.l.b16 %v292
    %v329 = vpack.c.b16 %v314, %v313
    %v330 = vpack.c.b16 %v316, %v315
    %v331 = vpack.c.b16 %v318, %v317
    %v332 = vpack.c.b16 %v320, %v319
    %v333 = vpack.c.b16 %v322, %v321
    %v334 = vpack.c.b16 %v324, %v323
    %v335 = vpack.c.b16 %v326, %v325
    %v336 = vpack.c.b16 %v328, %v327
    %345 = vmatprep.subr.bf16.mxu0 0
    %346 = vmatpush1.bf16.msra.mxu0 %v329
    %347 = vmatprep.subr.bf16.mxu0 0
    %348 = vmatpush1.bf16.msra.mxu0 %v330
    %349 = vmatprep.subr.bf16.mxu0 0
    %350 = vmatpush1.bf16.msra.mxu0 %v331
    %351 = vmatprep.subr.bf16.mxu0 0
    %352 = vmatpush1.bf16.msra.mxu0 %v332
    %353 = vmatprep.subr.bf16.mxu0 0
    %354 = vmatpush1.bf16.msra.mxu0 %v333
    %355 = vmatprep.subr.bf16.mxu0 0
    %356 = vmatpush1.bf16.msra.mxu0 %v334
    %357 = vmatprep.subr.bf16.mxu0 0
    %358 = vmatpush1.bf16.msra.mxu0 %v335
    %359 = vmatprep.subr.bf16.mxu0 0
    %360 = vmatpush1.bf16.msra.mxu0 %v336
    %361 = vmatprep.subr.bf16.mxu0 0
    %362 = vmatpush1.bf16.msra.mxu0 0
    %363 = vmatprep.subr.bf16.mxu0 0
    %364 = vmatpush1.bf16.msra.mxu0 0
    %365 = vmatprep.subr.bf16.mxu0 0
    %366 = vmatpush1.bf16.msra.mxu0 0
    %367 = vmatprep.subr.bf16.mxu0 0
    %368 = vmatpush1.bf16.msra.mxu0 0
    %369 = vmatprep.subr.bf16.mxu0 0
    %370 = vmatpush1.bf16.msra.mxu0 0
    %371 = vmatprep.subr.bf16.mxu0 0
    %372 = vmatpush1.bf16.msra.mxu0 0
    %373 = vmatprep.subr.bf16.mxu0 0
    %374 = vmatpush1.bf16.msra.mxu0 0
    %375 = vmatprep.subr.bf16.mxu0 0
    %376 = vmatpush1.bf16.msra.mxu0 0
    %377 = vmatprep.mubr.bf16.mxu0 0
    %378 = vmatmul.mubr.bf16.gmra.mrb[0].mxu0 %v275
    %v379 = vpop.f32.mrb[0].mxu0
    %v380 = vadd.f32 %v296, %v379
    %v381 = vpop.f32.mrb[0].mxu0
    %v382 = vpop.f32.mrb[0].mxu0
    %v383 = vpop.f32.mrb[0].mxu0
    %384 = vdwg.mxu0
    %v385 = vmax.f32 %v380, 0.0
    %v386 = vpack.c.bf16 %v385, %v385
    %s387 = scalar_lea.vmem [#allocation5], 192
    %v388 = vld [vmem:[%s387] sm:$0xf]
    %v389 = vld [vmem:[%s387 + $0x4] sm:$0xf]
    %v390 = vld [vmem:[%s387 + $0x8] sm:$0xf]
    %v391 = vld [vmem:[%s387 + $0xc] sm:$0xf]
    %v392 = vld [vmem:[%s387 + $0x10] sm:$0xf]
    %v393 = vld [vmem:[%s387 + $0x14] sm:$0xf]
    %v394 = vld [vmem:[%s387 + $0x18] sm:$0xf]
    %v395 = vld [vmem:[%s387 + $0x1c] sm:$0xf]
    %v396 = vld [vmem:[%s387 + $0x20] sm:$0xf]
    %v397 = vld [vmem:[%s387 + $0x24] sm:$0xf]
    %v398 = vld [vmem:[%s387 + $0x28] sm:$0xf]
    %v399 = vld [vmem:[%s387 + $0x2c] sm:$0xf]
    %v400 = vld [vmem:[%s387 + $0x30] sm:$0xf]
    %v401 = vld [vmem:[%s387 + $0x34] sm:$0xf]
    %v402 = vld [vmem:[%s387 + $0x38] sm:$0xf]
    %v403 = vld [vmem:[%s387 + $0x3c] sm:$0xf]
    %v404 = vlaneseq
    %v405 = vshrl.u32 %v404, 7
    %v406 = vsub.s32 3, %v405
    %v407 = vrot.slane %v53, %v406
    %v424 = vunpack.c.l.b16 %v388
    %v425 = vunpack.c.l.b16 %v389
    %v426 = vunpack.c.l.b16 %v390
    %v427 = vunpack.c.l.b16 %v391
    %v428 = vunpack.c.l.b16 %v392
    %v429 = vunpack.c.l.b16 %v393
    %v430 = vunpack.c.l.b16 %v394
    %v431 = vunpack.c.l.b16 %v395
    %v432 = vunpack.c.l.b16 %v396
    %v433 = vunpack.c.l.b16 %v397
    %v434 = vunpack.c.l.b16 %v398
    %v435 = vunpack.c.l.b16 %v399
    %v436 = vunpack.c.l.b16 %v400
    %v437 = vunpack.c.l.b16 %v401
    %v438 = vunpack.c.l.b16 %v402
    %v439 = vunpack.c.l.b16 %v403
    %v440 = vpack.c.b16 %v425, %v424
    %v441 = vpack.c.b16 %v427, %v426
    %v442 = vpack.c.b16 %v429, %v428
    %v443 = vpack.c.b16 %v431, %v430
    %v444 = vpack.c.b16 %v433, %v432
    %v445 = vpack.c.b16 %v435, %v434
    %v446 = vpack.c.b16 %v437, %v436
    %v447 = vpack.c.b16 %v439, %v438
    %456 = vmatprep.subr.bf16.mxu0 0
    %457 = vmatpush1.bf16.msra.mxu0 %v440
    %458 = vmatprep.subr.bf16.mxu0 0
    %459 = vmatpush1.bf16.msra.mxu0 %v441
    %460 = vmatprep.subr.bf16.mxu0 0
    %461 = vmatpush1.bf16.msra.mxu0 %v442
    %462 = vmatprep.subr.bf16.mxu0 0
    %463 = vmatpush1.bf16.msra.mxu0 %v443
    %464 = vmatprep.subr.bf16.mxu0 0
    %465 = vmatpush1.bf16.msra.mxu0 %v444
    %466 = vmatprep.subr.bf16.mxu0 0
    %467 = vmatpush1.bf16.msra.mxu0 %v445
    %468 = vmatprep.subr.bf16.mxu0 0
    %469 = vmatpush1.bf16.msra.mxu0 %v446
    %470 = vmatprep.subr.bf16.mxu0 0
    %471 = vmatpush1.bf16.msra.mxu0 %v447
    %472 = vmatprep.subr.bf16.mxu0 0
    %473 = vmatpush1.bf16.msra.mxu0 0
    %474 = vmatprep.subr.bf16.mxu0 0
    %475 = vmatpush1.bf16.msra.mxu0 0
    %476 = vmatprep.subr.bf16.mxu0 0
    %477 = vmatpush1.bf16.msra.mxu0 0
    %478 = vmatprep.subr.bf16.mxu0 0
    %479 = vmatpush1.bf16.msra.mxu0 0
    %480 = vmatprep.subr.bf16.mxu0 0
    %481 = vmatpush1.bf16.msra.mxu0 0
    %482 = vmatprep.subr.bf16.mxu0 0
    %483 = vmatpush1.bf16.msra.mxu0 0
    %484 = vmatprep.subr.bf16.mxu0 0
    %485 = vmatpush1.bf16.msra.mxu0 0
    %486 = vmatprep.subr.bf16.mxu0 0
    %487 = vmatpush1.bf16.msra.mxu0 0
    %488 = vmatprep.mubr.bf16.mxu0 0
    %489 = vmatmul.mubr.bf16.gmra.mrb[0].mxu0 %v386
    %v490 = vpop.f32.mrb[0].mxu0
    %v491 = vadd.f32 %v407, %v490
    %v492 = vpop.f32.mrb[0].mxu0
    %v493 = vpop.f32.mrb[0].mxu0
    %v494 = vpop.f32.mrb[0].mxu0
    %495 = vdwg.mxu0
    %v496 = vmax.f32 %v491, 0.0
    %v497 = vpack.c.bf16 %v496, %v496
    %s498 = scalar_lea.vmem [#allocation5], 256
    %v499 = vld [vmem:[%s498] sm:$0xf]
    %v500 = vld [vmem:[%s498 + $0x4] sm:$0xf]
    %v501 = vld [vmem:[%s498 + $0x8] sm:$0xf]
    %v502 = vld [vmem:[%s498 + $0xc] sm:$0xf]
    %v503 = vld [vmem:[%s498 + $0x10] sm:$0xf]
    %v504 = vld [vmem:[%s498 + $0x14] sm:$0xf]
    %v505 = vld [vmem:[%s498 + $0x18] sm:$0xf]
    %v506 = vld [vmem:[%s498 + $0x1c] sm:$0xf]
    %v507 = vld [vmem:[%s498 + $0x20] sm:$0xf]
    %v508 = vld [vmem:[%s498 + $0x24] sm:$0xf]
    %v509 = vld [vmem:[%s498 + $0x28] sm:$0xf]
    %v510 = vld [vmem:[%s498 + $0x2c] sm:$0xf]
    %v511 = vld [vmem:[%s498 + $0x30] sm:$0xf]
    %v512 = vld [vmem:[%s498 + $0x34] sm:$0xf]
    %v513 = vld [vmem:[%s498 + $0x38] sm:$0xf]
    %v514 = vld [vmem:[%s498 + $0x3c] sm:$0xf]
    %v515 = vlaneseq
    %v516 = vshrl.u32 %v515, 7
    %v517 = vsub.s32 4, %v516
    %v518 = vrot.slane %v53, %v517
    %v535 = vunpack.c.l.b16 %v499
    %v536 = vunpack.c.l.b16 %v500
    %v537 = vunpack.c.l.b16 %v501
    %v538 = vunpack.c.l.b16 %v502
    %v539 = vunpack.c.l.b16 %v503
    %v540 = vunpack.c.l.b16 %v504
    %v541 = vunpack.c.l.b16 %v505
    %v542 = vunpack.c.l.b16 %v506
    %v543 = vunpack.c.l.b16 %v507
    %v544 = vunpack.c.l.b16 %v508
    %v545 = vunpack.c.l.b16 %v509
    %v546 = vunpack.c.l.b16 %v510
    %v547 = vunpack.c.l.b16 %v511
    %v548 = vunpack.c.l.b16 %v512
    %v549 = vunpack.c.l.b16 %v513
    %v550 = vunpack.c.l.b16 %v514
    %v551 = vpack.c.b16 %v536, %v535
    %v552 = vpack.c.b16 %v538, %v537
    %v553 = vpack.c.b16 %v540, %v539
    %v554 = vpack.c.b16 %v542, %v541
    %v555 = vpack.c.b16 %v544, %v543
    %v556 = vpack.c.b16 %v546, %v545
    %v557 = vpack.c.b16 %v548, %v547
    %v558 = vpack.c.b16 %v550, %v549
    %567 = vmatprep.subr.bf16.mxu0 0
    %568 = vmatpush1.bf16.msra.mxu0 %v551
    %569 = vmatprep.subr.bf16.mxu0 0
    %570 = vmatpush1.bf16.msra.mxu0 %v552
    %571 = vmatprep.subr.bf16.mxu0 0
    %572 = vmatpush1.bf16.msra.mxu0 %v553
    %573 = vmatprep.subr.bf16.mxu0 0
    %574 = vmatpush1.bf16.msra.mxu0 %v554
    %575 = vmatprep.subr.bf16.mxu0 0
    %576 = vmatpush1.bf16.msra.mxu0 %v555
    %577 = vmatprep.subr.bf16.mxu0 0
    %578 = vmatpush1.bf16.msra.mxu0 %v556
    %579 = vmatprep.subr.bf16.mxu0 0
    %580 = vmatpush1.bf16.msra.mxu0 %v557
    %581 = vmatprep.subr.bf16.mxu0 0
    %582 = vmatpush1.bf16.msra.mxu0 %v558
    %583 = vmatprep.subr.bf16.mxu0 0
    %584 = vmatpush1.bf16.msra.mxu0 0
    %585 = vmatprep.subr.bf16.mxu0 0
    %586 = vmatpush1.bf16.msra.mxu0 0
    %587 = vmatprep.subr.bf16.mxu0 0
    %588 = vmatpush1.bf16.msra.mxu0 0
    %589 = vmatprep.subr.bf16.mxu0 0
    %590 = vmatpush1.bf16.msra.mxu0 0
    %591 = vmatprep.subr.bf16.mxu0 0
    %592 = vmatpush1.bf16.msra.mxu0 0
    %593 = vmatprep.subr.bf16.mxu0 0
    %594 = vmatpush1.bf16.msra.mxu0 0
    %595 = vmatprep.subr.bf16.mxu0 0
    %596 = vmatpush1.bf16.msra.mxu0 0
    %597 = vmatprep.subr.bf16.mxu0 0
    %598 = vmatpush1.bf16.msra.mxu0 0
    %599 = vmatprep.mubr.bf16.mxu0 0
    %600 = vmatmul.mubr.bf16.gmra.mrb[0].mxu0 %v497
    %v601 = vpop.f32.mrb[0].mxu0
    %v602 = vadd.f32 %v518, %v601
    %v603 = vpop.f32.mrb[0].mxu0
    %v604 = vpop.f32.mrb[0].mxu0
    %v605 = vpop.f32.mrb[0].mxu0
    %606 = vdwg.mxu0
    %v607 = vmax.f32 %v602, 0.0
    %v608 = vpack.c.bf16 %v607, %v607
    %s609 = scalar_lea.vmem [#allocation5], 320
    %v610 = vld [vmem:[%s609] sm:$0xf]
    %v611 = vld [vmem:[%s609 + $0x4] sm:$0xf]
    %v612 = vld [vmem:[%s609 + $0x8] sm:$0xf]
    %v613 = vld [vmem:[%s609 + $0xc] sm:$0xf]
    %v614 = vld [vmem:[%s609 + $0x10] sm:$0xf]
    %v615 = vld [vmem:[%s609 + $0x14] sm:$0xf]
    %v616 = vld [vmem:[%s609 + $0x18] sm:$0xf]
    %v617 = vld [vmem:[%s609 + $0x1c] sm:$0xf]
    %v618 = vld [vmem:[%s609 + $0x20] sm:$0xf]
    %v619 = vld [vmem:[%s609 + $0x24] sm:$0xf]
    %v620 = vld [vmem:[%s609 + $0x28] sm:$0xf]
    %v621 = vld [vmem:[%s609 + $0x2c] sm:$0xf]
    %v622 = vld [vmem:[%s609 + $0x30] sm:$0xf]
    %v623 = vld [vmem:[%s609 + $0x34] sm:$0xf]
    %v624 = vld [vmem:[%s609 + $0x38] sm:$0xf]
    %v625 = vld [vmem:[%s609 + $0x3c] sm:$0xf]
    %v626 = vlaneseq
    %v627 = vshrl.u32 %v626, 7
    %v628 = vsub.s32 5, %v627
    %v629 = vrot.slane %v53, %v628
    %v646 = vunpack.c.l.b16 %v610
    %v647 = vunpack.c.l.b16 %v611
    %v648 = vunpack.c.l.b16 %v612
    %v649 = vunpack.c.l.b16 %v613
    %v650 = vunpack.c.l.b16 %v614
    %v651 = vunpack.c.l.b16 %v615
    %v652 = vunpack.c.l.b16 %v616
    %v653 = vunpack.c.l.b16 %v617
    %v654 = vunpack.c.l.b16 %v618
    %v655 = vunpack.c.l.b16 %v619
    %v656 = vunpack.c.l.b16 %v620
    %v657 = vunpack.c.l.b16 %v621
    %v658 = vunpack.c.l.b16 %v622
    %v659 = vunpack.c.l.b16 %v623
    %v660 = vunpack.c.l.b16 %v624
    %v661 = vunpack.c.l.b16 %v625
    %v662 = vpack.c.b16 %v647, %v646
    %v663 = vpack.c.b16 %v649, %v648
    %v664 = vpack.c.b16 %v651, %v650
    %v665 = vpack.c.b16 %v653, %v652
    %v666 = vpack.c.b16 %v655, %v654
    %v667 = vpack.c.b16 %v657, %v656
    %v668 = vpack.c.b16 %v659, %v658
    %v669 = vpack.c.b16 %v661, %v660
    %678 = vmatprep.subr.bf16.mxu0 0
    %679 = vmatpush1.bf16.msra.mxu0 %v662
    %680 = vmatprep.subr.bf16.mxu0 0
    %681 = vmatpush1.bf16.msra.mxu0 %v663
    %682 = vmatprep.subr.bf16.mxu0 0
    %683 = vmatpush1.bf16.msra.mxu0 %v664
    %684 = vmatprep.subr.bf16.mxu0 0
    %685 = vmatpush1.bf16.msra.mxu0 %v665
    %686 = vmatprep.subr.bf16.mxu0 0
    %687 = vmatpush1.bf16.msra.mxu0 %v666
    %688 = vmatprep.subr.bf16.mxu0 0
    %689 = vmatpush1.bf16.msra.mxu0 %v667
    %690 = vmatprep.subr.bf16.mxu0 0
    %691 = vmatpush1.bf16.msra.mxu0 %v668
    %692 = vmatprep.subr.bf16.mxu0 0
    %693 = vmatpush1.bf16.msra.mxu0 %v669
    %694 = vmatprep.subr.bf16.mxu0 0
    %695 = vmatpush1.bf16.msra.mxu0 0
    %696 = vmatprep.subr.bf16.mxu0 0
    %697 = vmatpush1.bf16.msra.mxu0 0
    %698 = vmatprep.subr.bf16.mxu0 0
    %699 = vmatpush1.bf16.msra.mxu0 0
    %700 = vmatprep.subr.bf16.mxu0 0
    %701 = vmatpush1.bf16.msra.mxu0 0
    %702 = vmatprep.subr.bf16.mxu0 0
    %703 = vmatpush1.bf16.msra.mxu0 0
    %704 = vmatprep.subr.bf16.mxu0 0
    %705 = vmatpush1.bf16.msra.mxu0 0
    %706 = vmatprep.subr.bf16.mxu0 0
    %707 = vmatpush1.bf16.msra.mxu0 0
    %708 = vmatprep.subr.bf16.mxu0 0
    %709 = vmatpush1.bf16.msra.mxu0 0
    %710 = vmatprep.mubr.bf16.mxu0 0
    %711 = vmatmul.mubr.bf16.gmra.mrb[0].mxu0 %v608
    %v712 = vpop.f32.mrb[0].mxu0
    %v713 = vadd.f32 %v629, %v712
    %v714 = vpop.f32.mrb[0].mxu0
    %v715 = vpop.f32.mrb[0].mxu0
    %v716 = vpop.f32.mrb[0].mxu0
    %717 = vdwg.mxu0
    %v718 = vmax.f32 %v713, 0.0
    %v719 = vpack.c.bf16 %v718, %v718
    %s720 = scalar_lea.vmem [#allocation5], 384
    %v721 = vld [vmem:[%s720] sm:$0xf]
    %v722 = vld [vmem:[%s720 + $0x4] sm:$0xf]
    %v723 = vld [vmem:[%s720 + $0x8] sm:$0xf]
    %v724 = vld [vmem:[%s720 + $0xc] sm:$0xf]
    %v725 = vld [vmem:[%s720 + $0x10] sm:$0xf]
    %v726 = vld [vmem:[%s720 + $0x14] sm:$0xf]
    %v727 = vld [vmem:[%s720 + $0x18] sm:$0xf]
    %v728 = vld [vmem:[%s720 + $0x1c] sm:$0xf]
    %v729 = vld [vmem:[%s720 + $0x20] sm:$0xf]
    %v730 = vld [vmem:[%s720 + $0x24] sm:$0xf]
    %v731 = vld [vmem:[%s720 + $0x28] sm:$0xf]
    %v732 = vld [vmem:[%s720 + $0x2c] sm:$0xf]
    %v733 = vld [vmem:[%s720 + $0x30] sm:$0xf]
    %v734 = vld [vmem:[%s720 + $0x34] sm:$0xf]
    %v735 = vld [vmem:[%s720 + $0x38] sm:$0xf]
    %v736 = vld [vmem:[%s720 + $0x3c] sm:$0xf]
    %v737 = vlaneseq
    %v738 = vshrl.u32 %v737, 7
    %v739 = vsub.s32 6, %v738
    %v740 = vrot.slane %v53, %v739
    %v757 = vunpack.c.l.b16 %v721
    %v758 = vunpack.c.l.b16 %v722
    %v759 = vunpack.c.l.b16 %v723
    %v760 = vunpack.c.l.b16 %v724
    %v761 = vunpack.c.l.b16 %v725
    %v762 = vunpack.c.l.b16 %v726
    %v763 = vunpack.c.l.b16 %v727
    %v764 = vunpack.c.l.b16 %v728
    %v765 = vunpack.c.l.b16 %v729
    %v766 = vunpack.c.l.b16 %v730
    %v767 = vunpack.c.l.b16 %v731
    %v768 = vunpack.c.l.b16 %v732
    %v769 = vunpack.c.l.b16 %v733
    %v770 = vunpack.c.l.b16 %v734
    %v771 = vunpack.c.l.b16 %v735
    %v772 = vunpack.c.l.b16 %v736
    %v773 = vpack.c.b16 %v758, %v757
    %v774 = vpack.c.b16 %v760, %v759
    %v775 = vpack.c.b16 %v762, %v761
    %v776 = vpack.c.b16 %v764, %v763
    %v777 = vpack.c.b16 %v766, %v765
    %v778 = vpack.c.b16 %v768, %v767
    %v779 = vpack.c.b16 %v770, %v769
    %v780 = vpack.c.b16 %v772, %v771
    %789 = vmatprep.subr.bf16.mxu0 0
    %790 = vmatpush1.bf16.msra.mxu0 %v773
    %791 = vmatprep.subr.bf16.mxu0 0
    %792 = vmatpush1.bf16.msra.mxu0 %v774
    %793 = vmatprep.subr.bf16.mxu0 0
    %794 = vmatpush1.bf16.msra.mxu0 %v775
    %795 = vmatprep.subr.bf16.mxu0 0
    %796 = vmatpush1.bf16.msra.mxu0 %v776
    %797 = vmatprep.subr.bf16.mxu0 0
    %798 = vmatpush1.bf16.msra.mxu0 %v777
    %799 = vmatprep.subr.bf16.mxu0 0
    %800 = vmatpush1.bf16.msra.mxu0 %v778
    %801 = vmatprep.subr.bf16.mxu0 0
    %802 = vmatpush1.bf16.msra.mxu0 %v779
    %803 = vmatprep.subr.bf16.mxu0 0
    %804 = vmatpush1.bf16.msra.mxu0 %v780
    %805 = vmatprep.subr.bf16.mxu0 0
    %806 = vmatpush1.bf16.msra.mxu0 0
    %807 = vmatprep.subr.bf16.mxu0 0
    %808 = vmatpush1.bf16.msra.mxu0 0
    %809 = vmatprep.subr.bf16.mxu0 0
    %810 = vmatpush1.bf16.msra.mxu0 0
    %811 = vmatprep.subr.bf16.mxu0 0
    %812 = vmatpush1.bf16.msra.mxu0 0
    %813 = vmatprep.subr.bf16.mxu0 0
    %814 = vmatpush1.bf16.msra.mxu0 0
    %815 = vmatprep.subr.bf16.mxu0 0
    %816 = vmatpush1.bf16.msra.mxu0 0
    %817 = vmatprep.subr.bf16.mxu0 0
    %818 = vmatpush1.bf16.msra.mxu0 0
    %819 = vmatprep.subr.bf16.mxu0 0
    %820 = vmatpush1.bf16.msra.mxu0 0
    %821 = vmatprep.mubr.bf16.mxu0 0
    %822 = vmatmul.mubr.bf16.gmra.mrb[0].mxu0 %v719
    %v823 = vpop.f32.mrb[0].mxu0
    %v824 = vadd.f32 %v740, %v823
    %v825 = vpop.f32.mrb[0].mxu0
    %v826 = vpop.f32.mrb[0].mxu0
    %v827 = vpop.f32.mrb[0].mxu0
    %828 = vdwg.mxu0
    %829 = vst [vmem:[#allocation8] sm:$0xff] %v824
    // Predicated region
    $region26: #{tpu_custom_call.1} parent=1 // pred_check
      _
    $region27: #{tpu_custom_call.1} parent=1 // pred_check_branch
      %831 = sbr.rel (0) target = $region29
    $region28: #{tpu_custom_call.1} parent=1 // pred_region
      %s833 = ssub.s32 128, 128
      %834 = vsyncadd [#allocation4], %s833
      %s836 = sshll.u32 [#allocation8], 4
      %s837 = int_to_ptr.vmem [resolvable:$true] %s836
      %839 = dma.vmem_to_hbm [thread:$0]  %s837, 128, %s3, [#allocation4]
    $region29: #{tpu_custom_call.1} parent=1 // pred_fallthru
      _
    // Predicated region
    $region30: #{tpu_custom_call.1} parent=1 // pred_check
      _
    $region31: #{tpu_custom_call.1} parent=1 // pred_check_branch
      %841 = sbr.rel (0) target = $region33
    $region32: #{tpu_custom_call.1} parent=1 // pred_region
      %842 = dma.done [#allocation4], 128
    $region33: #{tpu_custom_call.1} parent=1 // pred_fallthru
      _
    %843 = vsyncpa [#allocation3], 1
    %844 = vsyncpa [#allocation6], 1
    %845 = vsyncpa [#allocation4], 1

</llo_original>
